<compile_context>
chip_gen: v7x
topology: tpu7x:2x2x1
jax: 0.10.0
libtpu: 0.0.40
codegen_flags: <defaults>
</compile_context>

<pallas_src>
import functools

import numpy as np
import jax
import jax.numpy as jnp
from jax.experimental import pallas as pl
from jax.experimental.pallas import tpu as pltpu


def _round_up(v, m):
    return (v + m - 1) // m * m


def gcn_kernel(a_ref, x_ref, w1_ref, b1_ref, w2_ref, b2_ref, o_ref, *,
               num_valid_out):
    # Layer 1: H = relu(A_norm @ (X @ W1) + b1).  bf16 MXU operands, f32 acc.
    xw = jnp.dot(x_ref[...], w1_ref[...], preferred_element_type=jnp.float32)
    h = jnp.dot(a_ref[...], xw.astype(jnp.bfloat16),
                preferred_element_type=jnp.float32) + b1_ref[...]
    h = jnp.maximum(h, 0.0)

    # Layer 2: Z = A_norm @ (H @ W2) + b2.
    hw = jnp.dot(h.astype(jnp.bfloat16), w2_ref[...],
                 preferred_element_type=jnp.float32)
    z = jnp.dot(a_ref[...], hw.astype(jnp.bfloat16),
                preferred_element_type=jnp.float32) + b2_ref[...]

    # Mask zero-padded class columns so they do not affect the softmax.
    col = jax.lax.broadcasted_iota(jnp.int32, z.shape, 1)
    z = jnp.where(col < num_valid_out, z, -1e30)

    # log_softmax over the class axis (dim=1), in f32.
    m = jnp.max(z, axis=-1, keepdims=True)
    zm = z - m
    s = jnp.sum(jnp.exp(zm), axis=-1, keepdims=True)
    o_ref[...] = (zm - jnp.log(s)).astype(o_ref.dtype)


def gcn_forward(a_norm, x, w1, b1, w2, b2):
    n, in_dim = x.shape
    hid = w1.shape[1]
    out_dim = w2.shape[1]

    # Lane-/sublane-dense padded shapes: feature axes -> multiples of 128,
    # node axis -> multiple of 8.
    n_pad = _round_up(max(n, 8), 8)
    in_pad = _round_up(in_dim, 128)
    hid_pad = _round_up(hid, 128)
    out_pad = _round_up(out_dim, 128)

    def pad(v, rows, cols, dtype):
        return jnp.pad(
            v, ((0, rows - v.shape[0]), (0, cols - v.shape[1]))).astype(dtype)

    a_p = pad(a_norm, n_pad, n_pad, jnp.bfloat16)
    x_p = pad(x, n_pad, in_pad, jnp.bfloat16)
    w1_p = pad(w1, in_pad, hid_pad, jnp.bfloat16)
    b1_p = pad(b1, 1, hid_pad, jnp.float32)
    w2_p = pad(w2, hid_pad, out_pad, jnp.bfloat16)
    b2_p = pad(b2, 1, out_pad, jnp.float32)

    cost = pl.CostEstimate(
        flops=2 * (n_pad * in_pad * hid_pad + n_pad * n_pad * hid_pad
                   + n_pad * hid_pad * out_pad + n_pad * n_pad * out_pad),
        transcendentals=n_pad * out_pad,
        bytes_accessed=(2 * (a_p.size + x_p.size + w1_p.size + w2_p.size)
                        + 4 * (b1_p.size + b2_p.size + n_pad * out_pad)),
    )

    out_p = pl.pallas_call(
        functools.partial(gcn_kernel, num_valid_out=out_dim),
        out_shape=jax.ShapeDtypeStruct((n_pad, out_pad), jnp.float32),
        in_specs=[pl.BlockSpec(memory_space=pltpu.MemorySpace.VMEM)] * 6,
        out_specs=pl.BlockSpec(memory_space=pltpu.MemorySpace.VMEM),
        cost_estimate=cost,
    )(a_p, x_p, w1_p, b1_p, w2_p, b2_p)

    return out_p[:n, :out_dim]


def build_normalized_adjacency(edge_index, num_nodes):
    # Host-side constant (numpy), matching PyG GCNConv gcn_norm semantics for
    # the directed edge_index the reference module supplies: messages flow
    # src (edge_index[0]) -> dst (edge_index[1]); self-loops added
    # (de-duplicated via maximum); symmetric deg^-1/2 scaling.
    a = np.zeros((num_nodes, num_nodes), np.float32)
    a[edge_index[1], edge_index[0]] = 1.0
    a = np.maximum(a, np.eye(num_nodes, dtype=np.float32))
    deg = a.sum(axis=1)
    d_inv_sqrt = 1.0 / np.sqrt(deg)
    return jnp.asarray(d_inv_sqrt[:, None] * a * d_inv_sqrt[None, :])


def glorot(key, fan_in, fan_out):
    limit = jnp.sqrt(6.0 / (fan_in + fan_out))
    return jax.random.uniform(key, (fan_in, fan_out), jnp.float32, -limit, limit)


if __name__ == "__main__":
    # Fixed graph / features from the reference module.
    edge_index = np.array([[0, 1, 2], [1, 2, 0]], dtype=np.int64)
    x = jnp.array(
        [[1, 0, 0, 0, 1],
         [0, 1, 0, 1, 0],
         [0, 0, 1, 0, 1]], dtype=jnp.float32)
    num_nodes, in_dim = x.shape
    hidden_dim, out_dim = 16, 2

    # Deterministic parameter init (GCNConv(5,16), GCNConv(16,2), biases zero).
    key = jax.random.PRNGKey(0)
    k1, k2 = jax.random.split(key)
    w1 = glorot(k1, in_dim, hidden_dim)
    b1 = jnp.zeros((1, hidden_dim), jnp.float32)
    w2 = glorot(k2, hidden_dim, out_dim)
    b2 = jnp.zeros((1, out_dim), jnp.float32)

    a_norm = build_normalized_adjacency(edge_index, num_nodes)

    out = gcn_forward(a_norm, x, w1, b1, w2, b2)
    out = jax.block_until_ready(out)

    # Tight check against a pure-JAX reference that mirrors the kernel's
    # bf16-operand / f32-accumulation arithmetic.
    a_bf = a_norm.astype(jnp.bfloat16)
    x_bf = x.astype(jnp.bfloat16)
    w1_bf = w1.astype(jnp.bfloat16)
    w2_bf = w2.astype(jnp.bfloat16)
    xw = jnp.dot(x_bf, w1_bf, preferred_element_type=jnp.float32)
    h = jnp.dot(a_bf, xw.astype(jnp.bfloat16),
                preferred_element_type=jnp.float32) + b1
    h = jnp.maximum(h, 0.0)
    hw = jnp.dot(h.astype(jnp.bfloat16), w2_bf,
                 preferred_element_type=jnp.float32)
    z = jnp.dot(a_bf, hw.astype(jnp.bfloat16),
                preferred_element_type=jnp.float32) + b2
    ref_bf16 = jax.nn.log_softmax(z, axis=1)
    assert jnp.allclose(out, ref_bf16, atol=1e-3), (out, ref_bf16)

    # Loose check against the full-f32 reference (original module semantics).
    ref_h = jnp.maximum(a_norm @ (x @ w1) + b1, 0.0)
    ref_z = a_norm @ (ref_h @ w2) + b2
    ref_f32 = jax.nn.log_softmax(ref_z, axis=1)
    assert jnp.allclose(out, ref_f32, atol=5e-2), (out, ref_f32)

    print("KERNEL_OK")
</pallas_src>

<mosaic_0001>
module attributes {stable_mosaic.version = 11 : i64} {
  func.func @gcn_kernel(%arg0: memref<8x8xbf16, #tpu.memory_space<vmem>>, %arg1: memref<8x128xbf16, #tpu.memory_space<vmem>>, %arg2: memref<128x128xbf16, #tpu.memory_space<vmem>>, %arg3: memref<1x128xf32, #tpu.memory_space<vmem>>, %arg4: memref<128x128xbf16, #tpu.memory_space<vmem>>, %arg5: memref<1x128xf32, #tpu.memory_space<vmem>>, %arg6: memref<8x128xf32, #tpu.memory_space<vmem>>) attributes {dimension_semantics = [], scalar_prefetch = 0 : i64, scratch_operands = 0 : i64, tpu.core_type = #tpu.core_type<tc>} {
    %c0 = arith.constant 0 : index
    %c0_0 = arith.constant 0 : index
    %0 = vector.load %arg1[%c0, %c0_0] : memref<8x128xbf16, #tpu.memory_space<vmem>>, vector<8x128xbf16>
    %c0_1 = arith.constant 0 : index
    %c0_2 = arith.constant 0 : index
    %1 = vector.load %arg2[%c0_1, %c0_2] : memref<128x128xbf16, #tpu.memory_space<vmem>>, vector<128x128xbf16>
    %cst = arith.constant dense<0.000000e+00> : vector<8x128xf32>
    %2 = tpu.matmul %0, %1, %cst {dimension_numbers = #tpu.dot_dimension_numbers<[1], [0], [0], [1], [0, 0, 1, 1], [], []>} : vector<8x128xbf16>, vector<128x128xbf16>, vector<8x128xf32> -> vector<8x128xf32>
    %c0_3 = arith.constant 0 : index
    %c0_4 = arith.constant 0 : index
    %3 = vector.load %arg0[%c0_3, %c0_4] : memref<8x8xbf16, #tpu.memory_space<vmem>>, vector<8x8xbf16>
    %4 = arith.truncf %2 : vector<8x128xf32> to vector<8x128xbf16>
    %cst_5 = arith.constant dense<0.000000e+00> : vector<8x128xf32>
    %5 = tpu.matmul %3, %4, %cst_5 {dimension_numbers = #tpu.dot_dimension_numbers<[1], [0], [0], [1], [0, 0, 1, 1], [], []>} : vector<8x8xbf16>, vector<8x128xbf16>, vector<8x128xf32> -> vector<8x128xf32>
    %c0_6 = arith.constant 0 : index
    %c0_7 = arith.constant 0 : index
    %6 = vector.load %arg3[%c0_6, %c0_7] : memref<1x128xf32, #tpu.memory_space<vmem>>, vector<1x128xf32>
    %7 = vector.broadcast %6 : vector<1x128xf32> to vector<8x128xf32>
    %8 = arith.addf %5, %7 : vector<8x128xf32>
    %cst_8 = arith.constant 0.000000e+00 : f32
    %9 = vector.broadcast %cst_8 : f32 to vector<8x128xf32>
    %10 = arith.maximumf %8, %9 : vector<8x128xf32>
    %11 = arith.truncf %10 : vector<8x128xf32> to vector<8x128xbf16>
    %c0_9 = arith.constant 0 : index
    %c0_10 = arith.constant 0 : index
    %12 = vector.load %arg4[%c0_9, %c0_10] : memref<128x128xbf16, #tpu.memory_space<vmem>>, vector<128x128xbf16>
    %cst_11 = arith.constant dense<0.000000e+00> : vector<8x128xf32>
    %13 = tpu.matmul %11, %12, %cst_11 {dimension_numbers = #tpu.dot_dimension_numbers<[1], [0], [0], [1], [0, 0, 1, 1], [], []>} : vector<8x128xbf16>, vector<128x128xbf16>, vector<8x128xf32> -> vector<8x128xf32>
    %c0_12 = arith.constant 0 : index
    %c0_13 = arith.constant 0 : index
    %14 = vector.load %arg0[%c0_12, %c0_13] : memref<8x8xbf16, #tpu.memory_space<vmem>>, vector<8x8xbf16>
    %15 = arith.truncf %13 : vector<8x128xf32> to vector<8x128xbf16>
    %cst_14 = arith.constant dense<0.000000e+00> : vector<8x128xf32>
    %16 = tpu.matmul %14, %15, %cst_14 {dimension_numbers = #tpu.dot_dimension_numbers<[1], [0], [0], [1], [0, 0, 1, 1], [], []>} : vector<8x8xbf16>, vector<8x128xbf16>, vector<8x128xf32> -> vector<8x128xf32>
    %c0_15 = arith.constant 0 : index
    %c0_16 = arith.constant 0 : index
    %17 = vector.load %arg5[%c0_15, %c0_16] : memref<1x128xf32, #tpu.memory_space<vmem>>, vector<1x128xf32>
    %18 = vector.broadcast %17 : vector<1x128xf32> to vector<8x128xf32>
    %19 = arith.addf %16, %18 : vector<8x128xf32>
    %20 = tpu.iota {dimensions = array<i32: 1>} : vector<8x128xi32>
    %c2_i32 = arith.constant 2 : i32
    %21 = vector.broadcast %c2_i32 : i32 to vector<8x128xi32>
    %22 = arith.cmpi slt, %20, %21 : vector<8x128xi32>
    %cst_17 = arith.constant -1.000000e+30 : f32
    %23 = vector.broadcast %cst_17 : f32 to vector<8x128xf32>
    %24 = arith.select %22, %19, %23 : vector<8x128xi1>, vector<8x128xf32>
    %cst_18 = arith.constant dense<0xFF800000> : vector<8xf32>
    %25 = vector.multi_reduction <maximumf>, %24, %cst_18 [1] : vector<8x128xf32> to vector<8xf32>
    %26 = vector.shape_cast %25 : vector<8xf32> to vector<8x1xf32>
    %27 = vector.broadcast %26 : vector<8x1xf32> to vector<8x128xf32>
    %28 = arith.subf %24, %27 : vector<8x128xf32>
    %29 = math.exp %28 : vector<8x128xf32>
    %cst_19 = arith.constant dense<0.000000e+00> : vector<8xf32>
    %30 = vector.multi_reduction <add>, %29, %cst_19 [1] : vector<8x128xf32> to vector<8xf32>
    %31 = vector.shape_cast %30 : vector<8xf32> to vector<8x1xf32>
    %32 = math.log %31 : vector<8x1xf32>
    %33 = vector.broadcast %32 : vector<8x1xf32> to vector<8x128xf32>
    %34 = arith.subf %28, %33 : vector<8x128xf32>
    %c0_20 = arith.constant 0 : index
    %c0_21 = arith.constant 0 : index
    %35 = vector.load %arg6[%c0_20, %c0_21] : memref<8x128xf32, #tpu.memory_space<vmem>>, vector<8x128xf32>
    tpu.vector_store %arg6[%c0_20, %c0_21], %34 {strides = array<i32>} : memref<8x128xf32, #tpu.memory_space<vmem>>, vector<8x128xf32>,
    return
  }
}

</mosaic_0001>

<llo_original>
// kernel: tpu_custom_call.1
$region0: #{tpu_custom_call.1}
  #allocation0 [shape = 'u32[]', space=smem, size = 0x4, offset = 0x4, fixed_abs, tag = 'smem constant byte address 0x4 - core index']
  #allocation1 [shape = 'u32[144,128]{1,0:T(1,128)}', space=vmem, size = 0x12000, scoped, tag = 'internal scratch']
  %s0 = inlined_call_operand.hbm [shape: bf16[8,8], index: 0, kind: input, shape index: {}]
  %s1 = inlined_call_operand.hbm [shape: bf16[8,128], index: 1, kind: input, shape index: {}]
  %s2 = inlined_call_operand.hbm [shape: bf16[128,128], index: 2, kind: input, shape index: {}]
  %s3 = inlined_call_operand.vmem [shape: f32[1,128], index: 3, kind: input, shape index: {}]
  %s4 = inlined_call_operand.hbm [shape: bf16[128,128], index: 4, kind: input, shape index: {}]
  %s5 = inlined_call_operand.vmem [shape: f32[1,128], index: 5, kind: input, shape index: {}]
  %s6 = inlined_call_operand.hbm [shape: f32[8,128], index: 6, kind: output, shape index: {}]
  %s7 = sld [smem:[#allocation0]]
  $region50: #{tpu_custom_call.1} parent=0
    _
  %s9 = ssub.s32 1, %s7
  %s10 = scalar_select 0, %s9, %s7
  $region1: #{tpu_custom_call.1} parent=0
    #allocation2 [shape = 'u8[2048]{0}', space=vmem, size = 0x800, scoped, tag = 'input window, operand 0, single buffered']
    #allocation3 [shape = 's32[1]{0}', space=sflag, size = 0x4, scoped, tag = 'scoped memory for tpu_custom_call.1']
    #allocation4 [shape = 's32[1]{0}', space=sflag, size = 0x4, scoped, tag = 'scoped memory for tpu_custom_call.1']
    #allocation5 [shape = 'u8[2048]{0}', space=vmem, size = 0x800, scoped, tag = 'input window, operand 1, single buffered']
    #allocation6 [shape = 's32[1]{0}', space=sflag, size = 0x4, scoped, tag = 'scoped memory for tpu_custom_call.1']
    #allocation7 [shape = 'u8[32768]{0}', space=vmem, size = 0x8000, scoped, tag = 'input window, operand 2, single buffered']
    #allocation8 [shape = 'u8[32768]{0}', space=vmem, size = 0x8000, scoped, tag = 'input window, operand 4, single buffered']
    #allocation9 [shape = 's32[1]{0}', space=sflag, size = 0x4, scoped, tag = 'scoped memory for tpu_custom_call.1']
    #allocation10 [shape = 'u8[4096]{0}', space=vmem, size = 0x1000, scoped, tag = 'output window, operand 0, single buffered']
    %11 = vsyncpa [#allocation3], 0
    %12 = vsyncpa [#allocation6], 0
    %13 = vsyncpa [#allocation9], 0
    %14 = vsyncpa [#allocation4], 0
    // Predicated region
    $region2: #{tpu_custom_call.1} parent=1 // pred_check
      _
    $region3: #{tpu_custom_call.1} parent=1 // pred_check_branch
      %16 = sbr.rel (0) target = $region5
    $region4: #{tpu_custom_call.1} parent=1 // pred_region
      %s18 = ssub.s32 64, 64
      %19 = vsyncadd [#allocation3], %s18
      %s21 = sshll.u32 [#allocation2], 4
      %s22 = int_to_ptr.vmem [resolvable:$true] %s21
      %24 = dma.hbm_to_vmem [thread:$0]  %s0, 64, %s22, [#allocation3]
    $region5: #{tpu_custom_call.1} parent=1 // pred_fallthru
      _
    // Predicated region
    $region6: #{tpu_custom_call.1} parent=1 // pred_check
      _
    $region7: #{tpu_custom_call.1} parent=1 // pred_check_branch
      %26 = sbr.rel (0) target = $region9
    $region8: #{tpu_custom_call.1} parent=1 // pred_region
      %s28 = ssub.s32 64, 64
      %29 = vsyncadd [#allocation6], %s28
      %s31 = sshll.u32 [#allocation5], 4
      %s32 = int_to_ptr.vmem [resolvable:$true] %s31
      %34 = dma.hbm_to_vmem [thread:$0]  %s1, 64, %s32, [#allocation6]
    $region9: #{tpu_custom_call.1} parent=1 // pred_fallthru
      _
    // Predicated region
    $region10: #{tpu_custom_call.1} parent=1 // pred_check
      _
    $region11: #{tpu_custom_call.1} parent=1 // pred_check_branch
      %36 = sbr.rel (0) target = $region13
    $region12: #{tpu_custom_call.1} parent=1 // pred_region
      %s38 = ssub.s32 1024, 1024
      %39 = vsyncadd [#allocation6], %s38
      %s40 = sshll.u32 [#allocation7], 4
      %s41 = int_to_ptr.vmem [resolvable:$true] %s40
      %46 = dma.hbm_to_vmem [thread:$0]  %s2, 1024, %s41, [#allocation6], 64, 64, 4
    $region13: #{tpu_custom_call.1} parent=1 // pred_fallthru
      _
    // Predicated region
    $region14: #{tpu_custom_call.1} parent=1 // pred_check
      _
    $region15: #{tpu_custom_call.1} parent=1 // pred_check_branch
      %48 = sbr.rel (0) target = $region17
    $region16: #{tpu_custom_call.1} parent=1 // pred_region
      _
    $region17: #{tpu_custom_call.1} parent=1 // pred_fallthru
      _
    // Predicated region
    $region18: #{tpu_custom_call.1} parent=1 // pred_check
      _
    $region19: #{tpu_custom_call.1} parent=1 // pred_check_branch
      %50 = sbr.rel (0) target = $region21
    $region20: #{tpu_custom_call.1} parent=1 // pred_region
      %s52 = ssub.s32 1024, 1024
      %53 = vsyncadd [#allocation9], %s52
      %s54 = sshll.u32 [#allocation8], 4
      %s55 = int_to_ptr.vmem [resolvable:$true] %s54
      %60 = dma.hbm_to_vmem [thread:$0]  %s4, 1024, %s55, [#allocation9], 64, 64, 4
    $region21: #{tpu_custom_call.1} parent=1 // pred_fallthru
      _
    // Predicated region
    $region22: #{tpu_custom_call.1} parent=1 // pred_check
      _
    $region23: #{tpu_custom_call.1} parent=1 // pred_check_branch
      %62 = sbr.rel (0) target = $region25
    $region24: #{tpu_custom_call.1} parent=1 // pred_region
      _
    $region25: #{tpu_custom_call.1} parent=1 // pred_fallthru
      _
    // Predicated region
    $region26: #{tpu_custom_call.1} parent=1 // pred_check
      _
    $region27: #{tpu_custom_call.1} parent=1 // pred_check_branch
      %64 = sbr.rel (0) target = $region29
    $region28: #{tpu_custom_call.1} parent=1 // pred_region
      %65 = dma.done [#allocation3], 64
    $region29: #{tpu_custom_call.1} parent=1 // pred_fallthru
      _
    // Predicated region
    $region30: #{tpu_custom_call.1} parent=1 // pred_check
      _
    $region31: #{tpu_custom_call.1} parent=1 // pred_check_branch
      %67 = sbr.rel (0) target = $region33
    $region32: #{tpu_custom_call.1} parent=1 // pred_region
      %68 = dma.done [#allocation6], 64
    $region33: #{tpu_custom_call.1} parent=1 // pred_fallthru
      _
    // Predicated region
    $region34: #{tpu_custom_call.1} parent=1 // pred_check
      _
    $region35: #{tpu_custom_call.1} parent=1 // pred_check_branch
      %70 = sbr.rel (0) target = $region37
    $region36: #{tpu_custom_call.1} parent=1 // pred_region
      %71 = dma.done [#allocation6], 1024
    $region37: #{tpu_custom_call.1} parent=1 // pred_fallthru
      _
    // Predicated region
    $region38: #{tpu_custom_call.1} parent=1 // pred_check
      _
    $region39: #{tpu_custom_call.1} parent=1 // pred_check_branch
      %73 = sbr.rel (0) target = $region41
    $region40: #{tpu_custom_call.1} parent=1 // pred_region
      %74 = dma.done [#allocation9], 1024
    $region41: #{tpu_custom_call.1} parent=1 // pred_fallthru
      _
    %v76 = vld [vmem:[#allocation5] sm:$0xf]
    %v77 = vld [vmem:[#allocation7] sm:$0xf]
    %v78 = vld [vmem:[#allocation7 + $0x4] sm:$0xf]
    %v79 = vld [vmem:[#allocation7 + $0x8] sm:$0xf]
    %v80 = vld [vmem:[#allocation7 + $0xc] sm:$0xf]
    %v81 = vld [vmem:[#allocation7 + $0x10] sm:$0xf]
    %v82 = vld [vmem:[#allocation7 + $0x14] sm:$0xf]
    %v83 = vld [vmem:[#allocation7 + $0x18] sm:$0xf]
    %v84 = vld [vmem:[#allocation7 + $0x1c] sm:$0xf]
    %v85 = vld [vmem:[#allocation7 + $0x20] sm:$0xf]
    %v86 = vld [vmem:[#allocation7 + $0x24] sm:$0xf]
    %v87 = vld [vmem:[#allocation7 + $0x28] sm:$0xf]
    %v88 = vld [vmem:[#allocation7 + $0x2c] sm:$0xf]
    %v89 = vld [vmem:[#allocation7 + $0x30] sm:$0xf]
    %v90 = vld [vmem:[#allocation7 + $0x34] sm:$0xf]
    %v91 = vld [vmem:[#allocation7 + $0x38] sm:$0xf]
    %v92 = vld [vmem:[#allocation7 + $0x3c] sm:$0xf]
    %v109 = vunpack.c.l.b16 %v77
    %v110 = vunpack.c.l.b16 %v78
    %v111 = vunpack.c.l.b16 %v79
    %v112 = vunpack.c.l.b16 %v80
    %v113 = vunpack.c.l.b16 %v81
    %v114 = vunpack.c.l.b16 %v82
    %v115 = vunpack.c.l.b16 %v83
    %v116 = vunpack.c.l.b16 %v84
    %v117 = vunpack.c.l.b16 %v85
    %v118 = vunpack.c.l.b16 %v86
    %v119 = vunpack.c.l.b16 %v87
    %v120 = vunpack.c.l.b16 %v88
    %v121 = vunpack.c.l.b16 %v89
    %v122 = vunpack.c.l.b16 %v90
    %v123 = vunpack.c.l.b16 %v91
    %v124 = vunpack.c.l.b16 %v92
    %v125 = vpack.c.b16 %v110, %v109
    %v126 = vpack.c.b16 %v112, %v111
    %v127 = vpack.c.b16 %v114, %v113
    %v128 = vpack.c.b16 %v116, %v115
    %v129 = vpack.c.b16 %v118, %v117
    %v130 = vpack.c.b16 %v120, %v119
    %v131 = vpack.c.b16 %v122, %v121
    %v132 = vpack.c.b16 %v124, %v123
    %141 = vmatprep.subr.bf16.mxu0 0
    %142 = vmatpush1.bf16.msra.mxu0 %v125
    %143 = vmatprep.subr.bf16.mxu0 0
    %144 = vmatpush1.bf16.msra.mxu0 %v126
    %145 = vmatprep.subr.bf16.mxu0 0
    %146 = vmatpush1.bf16.msra.mxu0 %v127
    %147 = vmatprep.subr.bf16.mxu0 0
    %148 = vmatpush1.bf16.msra.mxu0 %v128
    %149 = vmatprep.subr.bf16.mxu0 0
    %150 = vmatpush1.bf16.msra.mxu0 %v129
    %151 = vmatprep.subr.bf16.mxu0 0
    %152 = vmatpush1.bf16.msra.mxu0 %v130
    %153 = vmatprep.subr.bf16.mxu0 0
    %154 = vmatpush1.bf16.msra.mxu0 %v131
    %155 = vmatprep.subr.bf16.mxu0 0
    %156 = vmatpush1.bf16.msra.mxu0 %v132
    %157 = vmatprep.subr.bf16.mxu0 0
    %158 = vmatpush1.bf16.msra.mxu0 0
    %159 = vmatprep.subr.bf16.mxu0 0
    %160 = vmatpush1.bf16.msra.mxu0 0
    %161 = vmatprep.subr.bf16.mxu0 0
    %162 = vmatpush1.bf16.msra.mxu0 0
    %163 = vmatprep.subr.bf16.mxu0 0
    %164 = vmatpush1.bf16.msra.mxu0 0
    %165 = vmatprep.subr.bf16.mxu0 0
    %166 = vmatpush1.bf16.msra.mxu0 0
    %167 = vmatprep.subr.bf16.mxu0 0
    %168 = vmatpush1.bf16.msra.mxu0 0
    %169 = vmatprep.subr.bf16.mxu0 0
    %170 = vmatpush1.bf16.msra.mxu0 0
    %171 = vmatprep.subr.bf16.mxu0 0
    %172 = vmatpush1.bf16.msra.mxu0 0
    %173 = vmatprep.mubr.bf16.mxu0 0
    %174 = vmatmul.mubr.bf16.gmra.mrb[0].mxu0 %v76
    %v175 = vpop.f32.mrb[0].mxu0
    %v176 = vadd.f32 0.0, %v175
    %v177 = vpop.f32.mrb[0].mxu0
    %v178 = vpop.f32.mrb[0].mxu0
    %v179 = vpop.f32.mrb[0].mxu0
    %180 = vdwg.mxu0
    %v181 = vld [vmem:[#allocation2] sm:$0xf]
    %v182 = vpack.c.bf16 %v176, %v176
    %v183 = vld [vmem:[%s3] sm:$0x1]
    %v185 = vlaneseq
    %v186 = vshrl.u32 %v185, 7
    %v187 = vsub.s32 0, %v186
    %v188 = vrot.slane %v183, %v187
    %vm190 = vcmask 64512
    %v192 = vsel %vm190, %v181, 0
    %vm194 = vcmask 1043456
    %v196 = vsel %vm194, %v182, 0
    %198 = vmatprep.subr.bf16.mxu0 0
    %199 = vmatpush1.bf16.msra.mxu0 %v196
    %200 = vmatprep.subr.bf16.mxu0 0
    %201 = vmatpush1.bf16.msra.mxu0 0
    %202 = vmatprep.subr.bf16.mxu0 0
    %203 = vmatpush1.bf16.msra.mxu0 0
    %204 = vmatprep.subr.bf16.mxu0 0
    %205 = vmatpush1.bf16.msra.mxu0 0
    %206 = vmatprep.subr.bf16.mxu0 0
    %207 = vmatpush1.bf16.msra.mxu0 0
    %208 = vmatprep.subr.bf16.mxu0 0
    %209 = vmatpush1.bf16.msra.mxu0 0
    %210 = vmatprep.subr.bf16.mxu0 0
    %211 = vmatpush1.bf16.msra.mxu0 0
    %212 = vmatprep.subr.bf16.mxu0 0
    %213 = vmatpush1.bf16.msra.mxu0 0
    %214 = vmatprep.subr.bf16.mxu0 0
    %215 = vmatpush1.bf16.msra.mxu0 0
    %216 = vmatprep.subr.bf16.mxu0 0
    %217 = vmatpush1.bf16.msra.mxu0 0
    %218 = vmatprep.subr.bf16.mxu0 0
    %219 = vmatpush1.bf16.msra.mxu0 0
    %220 = vmatprep.subr.bf16.mxu0 0
    %221 = vmatpush1.bf16.msra.mxu0 0
    %222 = vmatprep.subr.bf16.mxu0 0
    %223 = vmatpush1.bf16.msra.mxu0 0
    %224 = vmatprep.subr.bf16.mxu0 0
    %225 = vmatpush1.bf16.msra.mxu0 0
    %226 = vmatprep.subr.bf16.mxu0 0
    %227 = vmatpush1.bf16.msra.mxu0 0
    %228 = vmatprep.subr.bf16.mxu0 0
    %229 = vmatpush1.bf16.msra.mxu0 0
    %230 = vmatprep.mubr.bf16.mxu0 0
    %231 = vmatmul.mubr.bf16.gmra.mrb[0].mxu0 %v192
    %v232 = vpop.f32.mrb[0].mxu0
    %v233 = vadd.f32 %v188, %v232
    %v234 = vpop.f32.mrb[0].mxu0
    %v235 = vpop.f32.mrb[0].mxu0
    %v236 = vpop.f32.mrb[0].mxu0
    %237 = vdwg.mxu0
    %v238 = vmax.f32 %v233, 0.0
    %v239 = vpack.c.bf16 %v238, %v238
    %v240 = vld [vmem:[#allocation8] sm:$0xf]
    %v241 = vld [vmem:[#allocation8 + $0x4] sm:$0xf]
    %v242 = vld [vmem:[#allocation8 + $0x8] sm:$0xf]
    %v243 = vld [vmem:[#allocation8 + $0xc] sm:$0xf]
    %v244 = vld [vmem:[#allocation8 + $0x10] sm:$0xf]
    %v245 = vld [vmem:[#allocation8 + $0x14] sm:$0xf]
    %v246 = vld [vmem:[#allocation8 + $0x18] sm:$0xf]
    %v247 = vld [vmem:[#allocation8 + $0x1c] sm:$0xf]
    %v248 = vld [vmem:[#allocation8 + $0x20] sm:$0xf]
    %v249 = vld [vmem:[#allocation8 + $0x24] sm:$0xf]
    %v250 = vld [vmem:[#allocation8 + $0x28] sm:$0xf]
    %v251 = vld [vmem:[#allocation8 + $0x2c] sm:$0xf]
    %v252 = vld [vmem:[#allocation8 + $0x30] sm:$0xf]
    %v253 = vld [vmem:[#allocation8 + $0x34] sm:$0xf]
    %v254 = vld [vmem:[#allocation8 + $0x38] sm:$0xf]
    %v255 = vld [vmem:[#allocation8 + $0x3c] sm:$0xf]
    %v272 = vunpack.c.l.b16 %v240
    %v273 = vunpack.c.l.b16 %v241
    %v274 = vunpack.c.l.b16 %v242
    %v275 = vunpack.c.l.b16 %v243
    %v276 = vunpack.c.l.b16 %v244
    %v277 = vunpack.c.l.b16 %v245
    %v278 = vunpack.c.l.b16 %v246
    %v279 = vunpack.c.l.b16 %v247
    %v280 = vunpack.c.l.b16 %v248
    %v281 = vunpack.c.l.b16 %v249
    %v282 = vunpack.c.l.b16 %v250
    %v283 = vunpack.c.l.b16 %v251
    %v284 = vunpack.c.l.b16 %v252
    %v285 = vunpack.c.l.b16 %v253
    %v286 = vunpack.c.l.b16 %v254
    %v287 = vunpack.c.l.b16 %v255
    %v288 = vpack.c.b16 %v273, %v272
    %v289 = vpack.c.b16 %v275, %v274
    %v290 = vpack.c.b16 %v277, %v276
    %v291 = vpack.c.b16 %v279, %v278
    %v292 = vpack.c.b16 %v281, %v280
    %v293 = vpack.c.b16 %v283, %v282
    %v294 = vpack.c.b16 %v285, %v284
    %v295 = vpack.c.b16 %v287, %v286
    %304 = vmatprep.subr.bf16.mxu0 0
    %305 = vmatpush1.bf16.msra.mxu0 %v288
    %306 = vmatprep.subr.bf16.mxu0 0
    %307 = vmatpush1.bf16.msra.mxu0 %v289
    %308 = vmatprep.subr.bf16.mxu0 0
    %309 = vmatpush1.bf16.msra.mxu0 %v290
    %310 = vmatprep.subr.bf16.mxu0 0
    %311 = vmatpush1.bf16.msra.mxu0 %v291
    %312 = vmatprep.subr.bf16.mxu0 0
    %313 = vmatpush1.bf16.msra.mxu0 %v292
    %314 = vmatprep.subr.bf16.mxu0 0
    %315 = vmatpush1.bf16.msra.mxu0 %v293
    %316 = vmatprep.subr.bf16.mxu0 0
    %317 = vmatpush1.bf16.msra.mxu0 %v294
    %318 = vmatprep.subr.bf16.mxu0 0
    %319 = vmatpush1.bf16.msra.mxu0 %v295
    %320 = vmatprep.subr.bf16.mxu0 0
    %321 = vmatpush1.bf16.msra.mxu0 0
    %322 = vmatprep.subr.bf16.mxu0 0
    %323 = vmatpush1.bf16.msra.mxu0 0
    %324 = vmatprep.subr.bf16.mxu0 0
    %325 = vmatpush1.bf16.msra.mxu0 0
    %326 = vmatprep.subr.bf16.mxu0 0
    %327 = vmatpush1.bf16.msra.mxu0 0
    %328 = vmatprep.subr.bf16.mxu0 0
    %329 = vmatpush1.bf16.msra.mxu0 0
    %330 = vmatprep.subr.bf16.mxu0 0
    %331 = vmatpush1.bf16.msra.mxu0 0
    %332 = vmatprep.subr.bf16.mxu0 0
    %333 = vmatpush1.bf16.msra.mxu0 0
    %334 = vmatprep.subr.bf16.mxu0 0
    %335 = vmatpush1.bf16.msra.mxu0 0
    %336 = vmatprep.mubr.bf16.mxu0 0
    %337 = vmatmul.mubr.bf16.gmra.mrb[0].mxu0 %v239
    %v338 = vpop.f32.mrb[0].mxu0
    %v339 = vadd.f32 0.0, %v338
    %v340 = vpop.f32.mrb[0].mxu0
    %v341 = vpop.f32.mrb[0].mxu0
    %v342 = vpop.f32.mrb[0].mxu0
    %343 = vdwg.mxu0
    %v344 = vpack.c.bf16 %v339, %v339
    %v345 = vld [vmem:[%s5] sm:$0x1]
    %v347 = vlaneseq
    %v348 = vshrl.u32 %v347, 7
    %v349 = vsub.s32 0, %v348
    %v350 = vrot.slane %v345, %v349
    %v353 = vsel %vm194, %v344, 0
    %355 = vmatprep.subr.bf16.mxu0 0
    %356 = vmatpush1.bf16.msra.mxu0 %v353
    %357 = vmatprep.subr.bf16.mxu0 0
    %358 = vmatpush1.bf16.msra.mxu0 0
    %359 = vmatprep.subr.bf16.mxu0 0
    %360 = vmatpush1.bf16.msra.mxu0 0
    %361 = vmatprep.subr.bf16.mxu0 0
    %362 = vmatpush1.bf16.msra.mxu0 0
    %363 = vmatprep.subr.bf16.mxu0 0
    %364 = vmatpush1.bf16.msra.mxu0 0
    %365 = vmatprep.subr.bf16.mxu0 0
    %366 = vmatpush1.bf16.msra.mxu0 0
    %367 = vmatprep.subr.bf16.mxu0 0
    %368 = vmatpush1.bf16.msra.mxu0 0
    %369 = vmatprep.subr.bf16.mxu0 0
    %370 = vmatpush1.bf16.msra.mxu0 0
    %371 = vmatprep.subr.bf16.mxu0 0
    %372 = vmatpush1.bf16.msra.mxu0 0
    %373 = vmatprep.subr.bf16.mxu0 0
    %374 = vmatpush1.bf16.msra.mxu0 0
    %375 = vmatprep.subr.bf16.mxu0 0
    %376 = vmatpush1.bf16.msra.mxu0 0
    %377 = vmatprep.subr.bf16.mxu0 0
    %378 = vmatpush1.bf16.msra.mxu0 0
    %379 = vmatprep.subr.bf16.mxu0 0
    %380 = vmatpush1.bf16.msra.mxu0 0
    %381 = vmatprep.subr.bf16.mxu0 0
    %382 = vmatpush1.bf16.msra.mxu0 0
    %383 = vmatprep.subr.bf16.mxu0 0
    %384 = vmatpush1.bf16.msra.mxu0 0
    %385 = vmatprep.subr.bf16.mxu0 0
    %386 = vmatpush1.bf16.msra.mxu0 0
    %387 = vmatprep.mubr.bf16.mxu0 0
    %388 = vmatmul.mubr.bf16.gmra.mrb[0].mxu0 %v192
    %v389 = vpop.f32.mrb[0].mxu0
    %v390 = vadd.f32 %v350, %v389
    %v391 = vpop.f32.mrb[0].mxu0
    %v392 = vpop.f32.mrb[0].mxu0
    %v393 = vpop.f32.mrb[0].mxu0
    %394 = vdwg.mxu0
    %v395 = vlaneseq
    %v396 = vand.u32 %v395, 127
    %vm397 = vcmp.lt.s32.totalorder %v396, 2
    %v398 = vsel %vm397, %v390, -1e+30
    %399 = vmax.xlane.f32.xlu0 %v398
    %v400 = vpop.xlane.xlu0 %399
    %v401 = vsub.f32 %v398, %v400
    %v402 = vmul.f32 %v401, 1.442695
    %v403 = vpow.pop %v402
    %404 = vadd.xlane.f32.xlu0 %v403
    %v405 = vpop.xlane.xlu0 %404
    %v406 = vlog2.pop %v405
    %v407 = vmul.f32 %v406, 0.6931472
    %v408 = vsub.f32 %v401, %v407
    %409 = vst [vmem:[#allocation10] sm:$0xff] %v408
    // Predicated region
    $region42: #{tpu_custom_call.1} parent=1 // pred_check
      _
    $region43: #{tpu_custom_call.1} parent=1 // pred_check_branch
      %411 = sbr.rel (0) target = $region45
    $region44: #{tpu_custom_call.1} parent=1 // pred_region
      %s413 = ssub.s32 128, 128
      %414 = vsyncadd [#allocation4], %s413
      %s416 = sshll.u32 [#allocation10], 4
      %s417 = int_to_ptr.vmem [resolvable:$true] %s416
      %419 = dma.vmem_to_hbm [thread:$0]  %s417, 128, %s6, [#allocation4]
    $region45: #{tpu_custom_call.1} parent=1 // pred_fallthru
      _
    // Predicated region
    $region46: #{tpu_custom_call.1} parent=1 // pred_check
      _
    $region47: #{tpu_custom_call.1} parent=1 // pred_check_branch
      %421 = sbr.rel (0) target = $region49
    $region48: #{tpu_custom_call.1} parent=1 // pred_region
      %422 = dma.done [#allocation4], 128
    $region49: #{tpu_custom_call.1} parent=1 // pred_fallthru
      _
    %423 = vsyncpa [#allocation3], 1
    %424 = vsyncpa [#allocation6], 1
    %425 = vsyncpa [#allocation9], 1
    %426 = vsyncpa [#allocation4], 1

</llo_original>
